<compile_context>
chip_gen: v6e
topology: v6e:2x2x1
jax: 0.10.0
libtpu: 0.0.40
codegen_flags: <defaults>
</compile_context>

<pallas_src>
import jax
import jax.numpy as jnp
from jax import lax
from jax.experimental import pallas as pl
from jax.experimental.pallas import tpu as pltpu


def critic_kernel(s_ref, a_ref, w1_ref, b1_ref, w2s_ref, w2a_ref, b2_ref,
                  w3t_ref, b3_ref, out_ref):
    # Activation tiles stream per grid step; weights are VMEM-resident.
    s = s_ref[...].astype(jnp.bfloat16)
    a = a_ref[...].astype(jnp.bfloat16)

    # layer1 + ReLU  (bf16 MXU matmul, f32 accumulate, f32 elementwise)
    xs = jnp.dot(s, w1_ref[...], preferred_element_type=jnp.float32)
    xs = jnp.maximum(xs + b1_ref[...], 0.0)

    # layer2 on concat([xs, action]) == xs @ W2s + action @ W2a, then ReLU
    h = jnp.dot(xs.astype(jnp.bfloat16), w2s_ref[...],
                preferred_element_type=jnp.float32)
    h = h + jnp.dot(a, w2a_ref[...], preferred_element_type=jnp.float32)
    h = jnp.maximum(h + b2_ref[...], 0.0)

    # layer3: contract the 128-wide hidden dim against the (1, 128) W3 row,
    # producing a lane-dense (1, TILE_B) result (4 B HBM writeback per batch
    # row instead of a zero-padded 128-lane f32 tile).
    out = lax.dot_general(
        w3t_ref[...], h.astype(jnp.bfloat16),
        dimension_numbers=(((1,), (1,)), ((), ())),
        preferred_element_type=jnp.float32)                  # (1, TILE_B)
    out_ref[...] = ((out + b3_ref[0, 0]).astype(out_ref.dtype))[None]


def critic_forward(state, action, params, *, tile_b=2048):
    """state: (B, S) f32, action: (B, A) f32, params in (in, out) layout."""
    w1, b1, w2s, w2a, b2, w3, b3 = params
    B, S = state.shape
    A = action.shape[1]
    L1 = w1.shape[1]
    L2 = w2s.shape[1]

    # Batch tiling.
    #  * Small batches: one full block (block dims == array dims, no padding).
    #  * Large batches: tiles of `tile_b` rows, capped so there are >= 2 grid
    #    steps (v7x megacore); the ragged last block is handled by Pallas and
    #    its garbage tail rows only reach output lanes that get sliced off.
    if B <= min(tile_b, 512):
        nb, tb = 1, B
    else:
        half = ((pl.cdiv(B, 2) + 7) // 8) * 8
        tb = min(tile_b, half)
        nb = pl.cdiv(B, tb)

    # Weights cast to bf16 once (VMEM-resident across grid steps); biases f32.
    w1b = w1.astype(jnp.bfloat16)
    w2sb = w2s.astype(jnp.bfloat16)
    w2ab = w2a.astype(jnp.bfloat16)
    w3t = w3.reshape(1, L2).astype(jnp.bfloat16)        # (1, 128) row
    b1f = b1.reshape(1, L1).astype(jnp.float32)
    b2f = b2.reshape(1, L2).astype(jnp.float32)
    b3f = b3.reshape(1, 1).astype(jnp.float32)

    state = state.astype(jnp.float32)
    action = action.astype(jnp.float32)

    out = pl.pallas_call(
        critic_kernel,
        out_shape=jax.ShapeDtypeStruct((nb, 1, tb), jnp.float32),
        grid=(nb,),
        in_specs=[
            # activations: tiled over batch (double-buffered by the pipeline)
            pl.BlockSpec((tb, S), lambda i: (i, 0)),
            pl.BlockSpec((tb, A), lambda i: (i, 0)),
            # weights / biases: constant block index -> stay VMEM-resident
            pl.BlockSpec(w1b.shape, lambda i: (0, 0)),
            pl.BlockSpec(b1f.shape, lambda i: (0, 0)),
            pl.BlockSpec(w2sb.shape, lambda i: (0, 0)),
            pl.BlockSpec(w2ab.shape, lambda i: (0, 0)),
            pl.BlockSpec(b2f.shape, lambda i: (0, 0)),
            pl.BlockSpec(w3t.shape, lambda i: (0, 0)),
            # scalar bias in SMEM
            pl.BlockSpec((1, 1), lambda i: (0, 0),
                         memory_space=pltpu.MemorySpace.SMEM),
        ],
        out_specs=pl.BlockSpec((1, 1, tb), lambda i: (i, 0, 0)),
        compiler_params=pltpu.CompilerParams(
            dimension_semantics=("parallel",)),
    )(state, action, w1b, b1f, w2sb, w2ab, b2f, w3t, b3f)

    # Flatten block-major output and keep only the real batch rows.
    return out.reshape(nb * tb)[:B].reshape(B, 1)


def init_params(key, state_size, action_size, layer1_size=256, layer2_size=128):
    """Deterministic init mimicking nn.Linear default (uniform +/- 1/sqrt(fan_in))."""
    ks = jax.random.split(key, 6)

    def lin(kw, kb, fan_in, fan_out):
        bound = 1.0 / jnp.sqrt(jnp.float32(fan_in))
        w = jax.random.uniform(kw, (fan_in, fan_out), jnp.float32, -bound, bound)
        b = jax.random.uniform(kb, (1, fan_out), jnp.float32, -bound, bound)
        return w, b

    w1, b1 = lin(ks[0], ks[1], state_size, layer1_size)
    w2_full, b2 = lin(ks[2], ks[3], layer1_size + action_size, layer2_size)
    w2s = w2_full[:layer1_size, :]
    w2a = w2_full[layer1_size:, :]
    w3, b3 = lin(ks[4], ks[5], layer2_size, 1)
    return (w1, b1, w2s, w2a, b2, w3, b3)


def critic_ref(state, action, params):
    """Pure-JAX f32 reference for correctness checking."""
    (w1, b1, w2s, w2a, b2, w3, b3) = params
    xs = jnp.maximum(state @ w1 + b1, 0.0)
    x = jnp.concatenate([xs, action], axis=1)
    w2 = jnp.concatenate([w2s, w2a], axis=0)
    h = jnp.maximum(x @ w2 + b2, 0.0)
    return h @ w3 + b3


if __name__ == "__main__":
    B, STATE, ACTION = 50, 32, 8  # small, module-consistent shapes

    key = jax.random.PRNGKey(0)
    k_s, k_a, k_p = jax.random.split(key, 3)
    state = jax.random.normal(k_s, (B, STATE), jnp.float32)
    action = jax.random.normal(k_a, (B, ACTION), jnp.float32)
    params = init_params(k_p, STATE, ACTION)

    ref = critic_ref(state, action, params)

    # 1) production path: B <= 512 -> single full-batch block, no padding.
    out = jax.block_until_ready(critic_forward(state, action, params))
    assert out.shape == (B, 1)
    # bf16 matmul operands with f32 accumulation -> loosened tolerance.
    assert jnp.allclose(out, ref, atol=5e-2, rtol=5e-2), (
        float(jnp.max(jnp.abs(out - ref))))

    # 2) multi-tile grid with a ragged last block (exercises pipelining,
    #    resident weights across steps, and the tail-discard path).
    out2 = jax.block_until_ready(
        critic_forward(state, action, params, tile_b=16))
    assert out2.shape == (B, 1)
    assert jnp.allclose(out2, ref, atol=5e-2, rtol=5e-2), (
        float(jnp.max(jnp.abs(out2 - ref))))

    print("KERNEL_OK")
</pallas_src>

<mosaic_0001>
module attributes {stable_mosaic.version = 11 : i64} {
  func.func @critic_kernel(%arg0: i32, %arg1: memref<50x32xf32, #tpu.memory_space<vmem>>, %arg2: memref<50x8xf32, #tpu.memory_space<vmem>>, %arg3: memref<32x256xbf16, #tpu.memory_space<vmem>>, %arg4: memref<1x256xf32, #tpu.memory_space<vmem>>, %arg5: memref<256x128xbf16, #tpu.memory_space<vmem>>, %arg6: memref<8x128xbf16, #tpu.memory_space<vmem>>, %arg7: memref<1x128xf32, #tpu.memory_space<vmem>>, %arg8: memref<1x128xbf16, #tpu.memory_space<vmem>>, %arg9: memref<1x1xf32, #tpu.memory_space<smem>>, %arg10: memref<1x1x50xf32, #tpu.memory_space<vmem>>) attributes {dimension_semantics = [#tpu.dimension_semantics<parallel>], iteration_bounds = array<i64: 1>, scalar_prefetch = 0 : i64, scratch_operands = 0 : i64, tpu.core_type = #tpu.core_type<tc>, window_params = [{transform_indices = @transform_0, window_bounds = array<i64: 50, 32>}, {transform_indices = @transform_1, window_bounds = array<i64: 50, 8>}, {pipeline_mode = #tpu.pipeline_mode<synchronous>, transform_indices = @transform_2, window_bounds = array<i64: 32, 256>}, {pipeline_mode = #tpu.pipeline_mode<synchronous>, transform_indices = @transform_3, window_bounds = array<i64: 1, 256>}, {pipeline_mode = #tpu.pipeline_mode<synchronous>, transform_indices = @transform_4, window_bounds = array<i64: 256, 128>}, {pipeline_mode = #tpu.pipeline_mode<synchronous>, transform_indices = @transform_5, window_bounds = array<i64: 8, 128>}, {pipeline_mode = #tpu.pipeline_mode<synchronous>, transform_indices = @transform_6, window_bounds = array<i64: 1, 128>}, {pipeline_mode = #tpu.pipeline_mode<synchronous>, transform_indices = @transform_7, window_bounds = array<i64: 1, 128>}, {transform_indices = @transform_8, window_bounds = array<i64: 1, 1>}, {transform_indices = @transform_9, window_bounds = array<i64: 1, 1, 50>}]} {
    %c0 = arith.constant 0 : index
    %c0_0 = arith.constant 0 : index
    %0 = vector.load %arg1[%c0, %c0_0] : memref<50x32xf32, #tpu.memory_space<vmem>>, vector<50x32xf32>
    %1 = arith.truncf %0 : vector<50x32xf32> to vector<50x32xbf16>
    %c0_1 = arith.constant 0 : index
    %c0_2 = arith.constant 0 : index
    %2 = vector.load %arg2[%c0_1, %c0_2] : memref<50x8xf32, #tpu.memory_space<vmem>>, vector<50x8xf32>
    %3 = arith.truncf %2 : vector<50x8xf32> to vector<50x8xbf16>
    %c0_3 = arith.constant 0 : index
    %c0_4 = arith.constant 0 : index
    %4 = vector.load %arg3[%c0_3, %c0_4] : memref<32x256xbf16, #tpu.memory_space<vmem>>, vector<32x256xbf16>
    %cst = arith.constant dense<0.000000e+00> : vector<50x256xf32>
    %5 = tpu.matmul %1, %4, %cst {dimension_numbers = #tpu.dot_dimension_numbers<[1], [0], [0], [1], [0, 0, 1, 1], [], []>} : vector<50x32xbf16>, vector<32x256xbf16>, vector<50x256xf32> -> vector<50x256xf32>
    %c0_5 = arith.constant 0 : index
    %c0_6 = arith.constant 0 : index
    %6 = vector.load %arg4[%c0_5, %c0_6] : memref<1x256xf32, #tpu.memory_space<vmem>>, vector<1x256xf32>
    %7 = vector.broadcast %6 : vector<1x256xf32> to vector<50x256xf32>
    %8 = arith.addf %5, %7 : vector<50x256xf32>
    %cst_7 = arith.constant 0.000000e+00 : f32
    %9 = vector.broadcast %cst_7 : f32 to vector<50x256xf32>
    %10 = arith.maximumf %8, %9 : vector<50x256xf32>
    %11 = arith.truncf %10 : vector<50x256xf32> to vector<50x256xbf16>
    %c0_8 = arith.constant 0 : index
    %c0_9 = arith.constant 0 : index
    %12 = vector.load %arg5[%c0_8, %c0_9] : memref<256x128xbf16, #tpu.memory_space<vmem>>, vector<256x128xbf16>
    %cst_10 = arith.constant dense<0.000000e+00> : vector<50x128xf32>
    %13 = tpu.matmul %11, %12, %cst_10 {dimension_numbers = #tpu.dot_dimension_numbers<[1], [0], [0], [1], [0, 0, 1, 1], [], []>} : vector<50x256xbf16>, vector<256x128xbf16>, vector<50x128xf32> -> vector<50x128xf32>
    %c0_11 = arith.constant 0 : index
    %c0_12 = arith.constant 0 : index
    %14 = vector.load %arg6[%c0_11, %c0_12] : memref<8x128xbf16, #tpu.memory_space<vmem>>, vector<8x128xbf16>
    %cst_13 = arith.constant dense<0.000000e+00> : vector<50x128xf32>
    %15 = tpu.matmul %3, %14, %cst_13 {dimension_numbers = #tpu.dot_dimension_numbers<[1], [0], [0], [1], [0, 0, 1, 1], [], []>} : vector<50x8xbf16>, vector<8x128xbf16>, vector<50x128xf32> -> vector<50x128xf32>
    %16 = arith.addf %13, %15 : vector<50x128xf32>
    %c0_14 = arith.constant 0 : index
    %c0_15 = arith.constant 0 : index
    %17 = vector.load %arg7[%c0_14, %c0_15] : memref<1x128xf32, #tpu.memory_space<vmem>>, vector<1x128xf32>
    %18 = vector.broadcast %17 : vector<1x128xf32> to vector<50x128xf32>
    %19 = arith.addf %16, %18 : vector<50x128xf32>
    %cst_16 = arith.constant 0.000000e+00 : f32
    %20 = vector.broadcast %cst_16 : f32 to vector<50x128xf32>
    %21 = arith.maximumf %19, %20 : vector<50x128xf32>
    %c0_17 = arith.constant 0 : index
    %c0_18 = arith.constant 0 : index
    %22 = vector.load %arg8[%c0_17, %c0_18] : memref<1x128xbf16, #tpu.memory_space<vmem>>, vector<1x128xbf16>
    %23 = arith.truncf %21 : vector<50x128xf32> to vector<50x128xbf16>
    %cst_19 = arith.constant dense<0.000000e+00> : vector<1x50xf32>
    %24 = tpu.matmul %22, %23, %cst_19 {dimension_numbers = #tpu.dot_dimension_numbers<[1], [1], [0], [0], [0, 0, 1, 0], [], []>} : vector<1x128xbf16>, vector<50x128xbf16>, vector<1x50xf32> -> vector<1x50xf32>
    %c0_20 = arith.constant 0 : index
    %c0_21 = arith.constant 0 : index
    %25 = memref.load %arg9[%c0_20, %c0_21] : memref<1x1xf32, #tpu.memory_space<smem>>
    %26 = vector.broadcast %25 : f32 to vector<1x50xf32>
    %27 = arith.addf %24, %26 : vector<1x50xf32>
    %28 = vector.shape_cast %27 : vector<1x50xf32> to vector<1x1x50xf32>
    %c0_22 = arith.constant 0 : index
    %c0_23 = arith.constant 0 : index
    %c0_24 = arith.constant 0 : index
    %29 = vector.load %arg10[%c0_22, %c0_23, %c0_24] : memref<1x1x50xf32, #tpu.memory_space<vmem>>, vector<1x1x50xf32>
    tpu.vector_store %arg10[%c0_22, %c0_23, %c0_24], %28 {strides = array<i32>} : memref<1x1x50xf32, #tpu.memory_space<vmem>>, vector<1x1x50xf32>,
    return
  }
  func.func @transform_0(%arg0: i32) -> (i32, i32) {
    %c0_i32 = arith.constant 0 : i32
    %c0_i32_0 = arith.constant 0 : i32
    return %arg0, %c0_i32 : i32, i32
  }
  func.func @transform_1(%arg0: i32) -> (i32, i32) {
    %c0_i32 = arith.constant 0 : i32
    %c0_i32_0 = arith.constant 0 : i32
    return %arg0, %c0_i32 : i32, i32
  }
  func.func @transform_2(%arg0: i32) -> (i32, i32) {
    %c0_i32 = arith.constant 0 : i32
    %c0_i32_0 = arith.constant 0 : i32
    %c0_i32_1 = arith.constant 0 : i32
    return %c0_i32, %c0_i32_0 : i32, i32
  }
  func.func @transform_3(%arg0: i32) -> (i32, i32) {
    %c0_i32 = arith.constant 0 : i32
    %c0_i32_0 = arith.constant 0 : i32
    %c0_i32_1 = arith.constant 0 : i32
    return %c0_i32, %c0_i32_0 : i32, i32
  }
  func.func @transform_4(%arg0: i32) -> (i32, i32) {
    %c0_i32 = arith.constant 0 : i32
    %c0_i32_0 = arith.constant 0 : i32
    %c0_i32_1 = arith.constant 0 : i32
    return %c0_i32, %c0_i32_0 : i32, i32
  }
  func.func @transform_5(%arg0: i32) -> (i32, i32) {
    %c0_i32 = arith.constant 0 : i32
    %c0_i32_0 = arith.constant 0 : i32
    %c0_i32_1 = arith.constant 0 : i32
    return %c0_i32, %c0_i32_0 : i32, i32
  }
  func.func @transform_6(%arg0: i32) -> (i32, i32) {
    %c0_i32 = arith.constant 0 : i32
    %c0_i32_0 = arith.constant 0 : i32
    %c0_i32_1 = arith.constant 0 : i32
    return %c0_i32, %c0_i32_0 : i32, i32
  }
  func.func @transform_7(%arg0: i32) -> (i32, i32) {
    %c0_i32 = arith.constant 0 : i32
    %c0_i32_0 = arith.constant 0 : i32
    %c0_i32_1 = arith.constant 0 : i32
    return %c0_i32, %c0_i32_0 : i32, i32
  }
  func.func @transform_8(%arg0: i32) -> (i32, i32) {
    %c0_i32 = arith.constant 0 : i32
    %c0_i32_0 = arith.constant 0 : i32
    %c0_i32_1 = arith.constant 0 : i32
    return %c0_i32, %c0_i32_0 : i32, i32
  }
  func.func @transform_9(%arg0: i32) -> (i32, i32, i32) {
    %c0_i32 = arith.constant 0 : i32
    %c0_i32_0 = arith.constant 0 : i32
    %c0_i32_1 = arith.constant 0 : i32
    return %arg0, %c0_i32, %c0_i32_0 : i32, i32, i32
  }
}

</mosaic_0001>

<llo_original>
// kernel: tpu_custom_call.1
$region0: #{tpu_custom_call.1}
  #allocation0 [shape = 'u32[]', space=smem, size = 0x4, offset = 0x4, fixed_abs, tag = 'smem constant byte address 0x4 - core index']
  #allocation1 [shape = 'u32[144,128]{1,0:T(1,128)}', space=vmem, size = 0x12000, scoped, tag = 'internal scratch']
  #allocation2 [shape = 'f32[1,1]{1,0:T(1,128)S(6)}', space=smem, size = 0x200, scoped, tag = 'scoped memory for tpu_custom_call.1']
  %s0 = inlined_call_operand.vmem [shape: f32[50,32], index: 0, kind: input, shape index: {}]
  %s1 = inlined_call_operand.vmem [shape: f32[50,8], index: 1, kind: input, shape index: {}]
  %s2 = inlined_call_operand.vmem [shape: bf16[32,256], index: 2, kind: input, shape index: {}]
  %s3 = inlined_call_operand.hbm [shape: f32[1,256], index: 3, kind: input, shape index: {}]
  %s4 = inlined_call_operand.vmem [shape: bf16[256,128], index: 4, kind: input, shape index: {}]
  %s5 = inlined_call_operand.hbm [shape: bf16[8,128], index: 5, kind: input, shape index: {}]
  %s6 = inlined_call_operand.vmem [shape: f32[1,128], index: 6, kind: input, shape index: {}]
  %s7 = inlined_call_operand.vmem [shape: bf16[1,128], index: 7, kind: input, shape index: {}]
  %s8 = inlined_call_operand.<no memory space> [shape: f32[1,1], index: 8, kind: input, shape index: {}]
  %s9 = inlined_call_operand.hbm [shape: f32[1,1,50], index: 9, kind: output, shape index: {}]
  %s10 = sld [smem:[#allocation0]]
  $region54: #{tpu_custom_call.1} parent=0
    _
  %s12 = ssub.s32 1, %s10
  %s13 = scalar_select 0, %s12, %s10
  %14 = sst [smem:[#allocation2]] %s8
  $region1: #{tpu_custom_call.1} parent=0
    #allocation3 [shape = 'u8[1024]{0}', space=vmem, size = 0x400, scoped, tag = 'input window, operand 3, single buffered']
    #allocation4 [shape = 's32[1]{0}', space=sflag, size = 0x4, scoped, tag = 'scoped memory for tpu_custom_call.1']
    #allocation5 [shape = 's32[1]{0}', space=sflag, size = 0x4, scoped, tag = 'scoped memory for tpu_custom_call.1']
    #allocation6 [shape = 'u8[2048]{0}', space=vmem, size = 0x800, scoped, tag = 'input window, operand 5, single buffered']
    #allocation7 [shape = 's32[1]{0}', space=sflag, size = 0x4, scoped, tag = 'scoped memory for tpu_custom_call.1']
    #allocation8 [shape = 'u8[512]{0}', space=vmem, size = 0x400, scoped, tag = 'output window, operand 0, single buffered']
    %15 = vsyncpa [#allocation4], 0
    %16 = vsyncpa [#allocation7], 0
    %17 = vsyncpa [#allocation5], 0
    // Predicated region
    $region2: #{tpu_custom_call.1} parent=1 // pred_check
      _
    $region3: #{tpu_custom_call.1} parent=1 // pred_check_branch
      %19 = sbr.rel (0) target = $region5
    $region4: #{tpu_custom_call.1} parent=1 // pred_region
      _
    $region5: #{tpu_custom_call.1} parent=1 // pred_fallthru
      _
    // Predicated region
    $region6: #{tpu_custom_call.1} parent=1 // pred_check
      _
    $region7: #{tpu_custom_call.1} parent=1 // pred_check_branch
      %21 = sbr.rel (0) target = $region9
    $region8: #{tpu_custom_call.1} parent=1 // pred_region
      _
    $region9: #{tpu_custom_call.1} parent=1 // pred_fallthru
      _
    // Predicated region
    $region10: #{tpu_custom_call.1} parent=1 // pred_check
      _
    $region11: #{tpu_custom_call.1} parent=1 // pred_check_branch
      %23 = sbr.rel (0) target = $region13
    $region12: #{tpu_custom_call.1} parent=1 // pred_region
      _
    $region13: #{tpu_custom_call.1} parent=1 // pred_fallthru
      _
    // Predicated region
    $region14: #{tpu_custom_call.1} parent=1 // pred_check
      _
    $region15: #{tpu_custom_call.1} parent=1 // pred_check_branch
      %25 = sbr.rel (0) target = $region17
    $region16: #{tpu_custom_call.1} parent=1 // pred_region
      %s27 = ssub.s32 32, 32
      %28 = vsyncadd [#allocation4], %s27
      %s30 = sshll.u32 [#allocation3], 4
      %s31 = int_to_ptr.vmem [resolvable:$true] %s30
      %33 = dma.hbm_to_vmem [thread:$0]  %s3, 32, %s31, [#allocation4]
    $region17: #{tpu_custom_call.1} parent=1 // pred_fallthru
      _
    // Predicated region
    $region18: #{tpu_custom_call.1} parent=1 // pred_check
      _
    $region19: #{tpu_custom_call.1} parent=1 // pred_check_branch
      %35 = sbr.rel (0) target = $region21
    $region20: #{tpu_custom_call.1} parent=1 // pred_region
      _
    $region21: #{tpu_custom_call.1} parent=1 // pred_fallthru
      _
    // Predicated region
    $region22: #{tpu_custom_call.1} parent=1 // pred_check
      _
    $region23: #{tpu_custom_call.1} parent=1 // pred_check_branch
      %37 = sbr.rel (0) target = $region25
    $region24: #{tpu_custom_call.1} parent=1 // pred_region
      %s39 = ssub.s32 64, 64
      %40 = vsyncadd [#allocation7], %s39
      %s42 = sshll.u32 [#allocation6], 4
      %s43 = int_to_ptr.vmem [resolvable:$true] %s42
      %45 = dma.hbm_to_vmem [thread:$0]  %s5, 64, %s43, [#allocation7]
    $region25: #{tpu_custom_call.1} parent=1 // pred_fallthru
      _
    // Predicated region
    $region26: #{tpu_custom_call.1} parent=1 // pred_check
      _
    $region27: #{tpu_custom_call.1} parent=1 // pred_check_branch
      %47 = sbr.rel (0) target = $region29
    $region28: #{tpu_custom_call.1} parent=1 // pred_region
      _
    $region29: #{tpu_custom_call.1} parent=1 // pred_fallthru
      _
    // Predicated region
    $region30: #{tpu_custom_call.1} parent=1 // pred_check
      _
    $region31: #{tpu_custom_call.1} parent=1 // pred_check_branch
      %49 = sbr.rel (0) target = $region33
    $region32: #{tpu_custom_call.1} parent=1 // pred_region
      _
    $region33: #{tpu_custom_call.1} parent=1 // pred_fallthru
      _
    // Predicated region
    $region34: #{tpu_custom_call.1} parent=1 // pred_check
      _
    $region35: #{tpu_custom_call.1} parent=1 // pred_check_branch
      %51 = sbr.rel (0) target = $region37
    $region36: #{tpu_custom_call.1} parent=1 // pred_region
      _
    $region37: #{tpu_custom_call.1} parent=1 // pred_fallthru
      _
    // Predicated region
    $region38: #{tpu_custom_call.1} parent=1 // pred_check
      _
    $region39: #{tpu_custom_call.1} parent=1 // pred_check_branch
      %53 = sbr.rel (0) target = $region41
    $region40: #{tpu_custom_call.1} parent=1 // pred_region
      %54 = dma.done [#allocation4], 32
    $region41: #{tpu_custom_call.1} parent=1 // pred_fallthru
      _
    // Predicated region
    $region42: #{tpu_custom_call.1} parent=1 // pred_check
      _
    $region43: #{tpu_custom_call.1} parent=1 // pred_check_branch
      %56 = sbr.rel (0) target = $region45
    $region44: #{tpu_custom_call.1} parent=1 // pred_region
      %57 = dma.done [#allocation7], 64
    $region45: #{tpu_custom_call.1} parent=1 // pred_fallthru
      _
    %v59 = vld [vmem:[%s0] sm:$0xff]
    %v60 = vld [vmem:[%s0 + $0x8] sm:$0xff]
    %v61 = vld [vmem:[%s0 + $0x10] sm:$0xff]
    %v62 = vld [vmem:[%s0 + $0x18] sm:$0xff]
    %v63 = vld [vmem:[%s0 + $0x20] sm:$0xff]
    %v64 = vld [vmem:[%s0 + $0x28] sm:$0xff]
    %v65 = vld [vmem:[%s0 + $0x30] sm:$0x3]
    %v66 = vpack.c.bf16 %v60, %v59
    %v67 = vpack.c.bf16 %v62, %v61
    %v68 = vpack.c.bf16 %v64, %v63
    %v69 = vpack.c.bf16 %v65, %v65
    %v70 = vld [vmem:[%s1] sm:$0xff]
    %v71 = vld [vmem:[%s1 + $0x8] sm:$0xff]
    %v72 = vld [vmem:[%s1 + $0x10] sm:$0xff]
    %v73 = vld [vmem:[%s1 + $0x18] sm:$0xff]
    %v74 = vld [vmem:[%s1 + $0x20] sm:$0xff]
    %v75 = vld [vmem:[%s1 + $0x28] sm:$0xff]
    %v76 = vld [vmem:[%s1 + $0x30] sm:$0x3]
    %v77 = vpack.c.bf16 %v71, %v70
    %v78 = vpack.c.bf16 %v73, %v72
    %v79 = vpack.c.bf16 %v75, %v74
    %v80 = vpack.c.bf16 %v76, %v76
    %v81 = vld [vmem:[%s2] sm:$0xff]
    %v82 = vld [vmem:[%s2 + $0x8] sm:$0xff]
    %v83 = vld [vmem:[%s2 + $0x10] sm:$0xff]
    %v84 = vld [vmem:[%s2 + $0x18] sm:$0xff]
    %v85 = vld [vmem:[#allocation3] sm:$0x3]
    %v87 = vlaneseq
    %v88 = vshrl.u32 %v87, 7
    %v89 = vsub.s32 0, %v88
    %v90 = vrot.slane %v85, %v89
    %v91 = vlaneseq
    %v92 = vshrl.u32 %v91, 7
    %v93 = vsub.s32 1, %v92
    %v94 = vrot.slane %v85, %v93
    %v101 = vunpack.c.l.b16 %v81
    %v102 = vunpack.c.h.b16 %v81
    %v103 = vunpack.c.l.b16 %v82
    %v104 = vunpack.c.h.b16 %v82
    %v105 = vunpack.c.l.b16 %v83
    %v106 = vunpack.c.h.b16 %v83
    %v107 = vunpack.c.l.b16 %v84
    %v108 = vunpack.c.h.b16 %v84
    %v109 = vpack.c.b16 %v103, %v101
    %v110 = vpack.c.b16 %v104, %v102
    %v111 = vpack.c.b16 %v107, %v105
    %v112 = vpack.c.b16 %v108, %v106
    %vm117 = vcmask 261120
    %v119 = vsel %vm117, %v66, 0
    %v122 = vsel %vm117, %v67, 0
    %v125 = vsel %vm117, %v68, 0
    %v128 = vsel %vm117, %v69, 0
    %130 = vmatprep.subr.bf16.mxu0 0
    %131 = vmatpush1.bf16.msra.mxu0 0
    %132 = vmatprep.subr.bf16.mxu0 0
    %133 = vmatpush1.bf16.msra.mxu0 0
    %134 = vmatprep.subr.bf16.mxu0 0
    %135 = vmatpush1.bf16.msra.mxu0 0
    %136 = vmatprep.subr.bf16.mxu0 0
    %137 = vmatpush1.bf16.msra.mxu0 0
    %138 = vmatprep.subr.bf16.mxu0 0
    %139 = vmatpush1.bf16.msra.mxu0 0
    %140 = vmatprep.subr.bf16.mxu0 0
    %141 = vmatpush1.bf16.msra.mxu0 0
    %142 = vmatprep.subr.bf16.mxu0 %v112
    %143 = vmatpush1.bf16.msra.mxu0 %v111
    %144 = vmatprep.subr.bf16.mxu0 %v110
    %145 = vmatpush1.bf16.msra.mxu0 %v109
    %146 = vmatprep.subr.bf16.mxu0 0
    %147 = vmatpush2.bf16.msra.mxu0 0
    %148 = vmatprep.subr.bf16.mxu0 0
    %149 = vmatpush2.bf16.msra.mxu0 0
    %150 = vmatprep.subr.bf16.mxu0 0
    %151 = vmatpush2.bf16.msra.mxu0 0
    %152 = vmatprep.subr.bf16.mxu0 0
    %153 = vmatpush2.bf16.msra.mxu0 0
    %154 = vmatprep.subr.bf16.mxu0 0
    %155 = vmatpush2.bf16.msra.mxu0 0
    %156 = vmatprep.subr.bf16.mxu0 0
    %157 = vmatpush2.bf16.msra.mxu0 0
    %158 = vmatprep.subr.bf16.mxu0 0
    %159 = vmatpush2.bf16.msra.mxu0 0
    %160 = vmatprep.subr.bf16.mxu0 0
    %161 = vmatpush2.bf16.msra.mxu0 0
    %162 = vmatprep.mubr.bf16.mxu0 0
    %163 = vmatmul.mubr.bf16.gmra.mxu0 %v119
    %v164 = vpop.f32.mrf.mxu0
    %v165 = vadd.f32 %v90, %v164
    %v166 = vpop.f32.mrf.mxu0
    %v167 = vadd.f32 %v94, %v166
    %v168 = vpop.f32.mrf.mxu0
    %v169 = vadd.f32 %v90, %v168
    %v170 = vpop.f32.mrf.mxu0
    %v171 = vadd.f32 %v94, %v170
    %172 = vmatprep.mubr.bf16.mxu0 0
    %173 = vmatmul.mubr.bf16.gmra.mxu0 %v122
    %v174 = vpop.f32.mrf.mxu0
    %v175 = vadd.f32 %v90, %v174
    %v176 = vpop.f32.mrf.mxu0
    %v177 = vadd.f32 %v94, %v176
    %v178 = vpop.f32.mrf.mxu0
    %v179 = vadd.f32 %v90, %v178
    %v180 = vpop.f32.mrf.mxu0
    %v181 = vadd.f32 %v94, %v180
    %182 = vmatprep.mubr.bf16.mxu0 0
    %183 = vmatmul.mubr.bf16.gmra.mxu0 %v125
    %v184 = vpop.f32.mrf.mxu0
    %v185 = vadd.f32 %v90, %v184
    %v186 = vpop.f32.mrf.mxu0
    %v187 = vadd.f32 %v94, %v186
    %v188 = vpop.f32.mrf.mxu0
    %v189 = vadd.f32 %v90, %v188
    %v190 = vpop.f32.mrf.mxu0
    %v191 = vadd.f32 %v94, %v190
    %192 = vmatprep.mubr.bf16.mxu0 0
    %193 = vmatmul.mubr.bf16.gmra.mxu0 %v128
    %v194 = vpop.f32.mrf.mxu0
    %v195 = vadd.f32 %v90, %v194
    %v196 = vpop.f32.mrf.mxu0
    %v197 = vadd.f32 %v94, %v196
    %v198 = vpop.f32.mrf.mxu0
    %v199 = vpop.f32.mrf.mxu0
    %200 = vdwg.mxu0
    %v201 = vmax.f32 %v165, 0.0
    %v202 = vmax.f32 %v167, 0.0
    %v203 = vmax.f32 %v169, 0.0
    %v204 = vmax.f32 %v171, 0.0
    %v205 = vmax.f32 %v175, 0.0
    %v206 = vmax.f32 %v177, 0.0
    %v207 = vmax.f32 %v179, 0.0
    %v208 = vmax.f32 %v181, 0.0
    %v209 = vmax.f32 %v185, 0.0
    %v210 = vmax.f32 %v187, 0.0
    %v211 = vmax.f32 %v189, 0.0
    %v212 = vmax.f32 %v191, 0.0
    %v213 = vmax.f32 %v195, 0.0
    %v214 = vmax.f32 %v197, 0.0
    %v215 = vpack.c.bf16 %v203, %v201
    %v216 = vpack.c.bf16 %v204, %v202
    %v217 = vpack.c.bf16 %v207, %v205
    %v218 = vpack.c.bf16 %v208, %v206
    %v219 = vpack.c.bf16 %v211, %v209
    %v220 = vpack.c.bf16 %v212, %v210
    %v221 = vpack.c.bf16 %v213, %v213
    %v222 = vpack.c.bf16 %v214, %v214
    %v223 = vld [vmem:[%s4] sm:$0xf]
    %v224 = vld [vmem:[%s4 + $0x4] sm:$0xf]
    %v225 = vld [vmem:[%s4 + $0x8] sm:$0xf]
    %v226 = vld [vmem:[%s4 + $0xc] sm:$0xf]
    %v227 = vld [vmem:[%s4 + $0x10] sm:$0xf]
    %v228 = vld [vmem:[%s4 + $0x14] sm:$0xf]
    %v229 = vld [vmem:[%s4 + $0x18] sm:$0xf]
    %v230 = vld [vmem:[%s4 + $0x1c] sm:$0xf]
    %v231 = vld [vmem:[%s4 + $0x20] sm:$0xf]
    %v232 = vld [vmem:[%s4 + $0x24] sm:$0xf]
    %v233 = vld [vmem:[%s4 + $0x28] sm:$0xf]
    %v234 = vld [vmem:[%s4 + $0x2c] sm:$0xf]
    %v235 = vld [vmem:[%s4 + $0x30] sm:$0xf]
    %v236 = vld [vmem:[%s4 + $0x34] sm:$0xf]
    %v237 = vld [vmem:[%s4 + $0x38] sm:$0xf]
    %v238 = vld [vmem:[%s4 + $0x3c] sm:$0xf]
    %v239 = vld [vmem:[%s4 + $0x40] sm:$0xf]
    %v240 = vld [vmem:[%s4 + $0x44] sm:$0xf]
    %v241 = vld [vmem:[%s4 + $0x48] sm:$0xf]
    %v242 = vld [vmem:[%s4 + $0x4c] sm:$0xf]
    %v243 = vld [vmem:[%s4 + $0x50] sm:$0xf]
    %v244 = vld [vmem:[%s4 + $0x54] sm:$0xf]
    %v245 = vld [vmem:[%s4 + $0x58] sm:$0xf]
    %v246 = vld [vmem:[%s4 + $0x5c] sm:$0xf]
    %v247 = vld [vmem:[%s4 + $0x60] sm:$0xf]
    %v248 = vld [vmem:[%s4 + $0x64] sm:$0xf]
    %v249 = vld [vmem:[%s4 + $0x68] sm:$0xf]
    %v250 = vld [vmem:[%s4 + $0x6c] sm:$0xf]
    %v251 = vld [vmem:[%s4 + $0x70] sm:$0xf]
    %v252 = vld [vmem:[%s4 + $0x74] sm:$0xf]
    %v253 = vld [vmem:[%s4 + $0x78] sm:$0xf]
    %v254 = vld [vmem:[%s4 + $0x7c] sm:$0xf]
    %v255 = vld [vmem:[#allocation6] sm:$0xf]
    %vm256 = vcmask 64512
    %v258 = vsel %vm256, %v77, 0
    %v261 = vsel %vm256, %v78, 0
    %v264 = vsel %vm256, %v79, 0
    %v267 = vsel %vm256, %v80, 0
    %vm269 = vcmask 1043456
    %v271 = vsel %vm269, %v255, 0
    %273 = vmatprep.subr.bf16.mxu0 0
    %274 = vmatpush1.bf16.msra.mxu0 0
    %275 = vmatprep.subr.bf16.mxu0 0
    %276 = vmatpush1.bf16.msra.mxu0 0
    %277 = vmatprep.subr.bf16.mxu0 0
    %278 = vmatpush1.bf16.msra.mxu0 0
    %279 = vmatprep.subr.bf16.mxu0 0
    %280 = vmatpush1.bf16.msra.mxu0 0
    %281 = vmatprep.subr.bf16.mxu0 0
    %282 = vmatpush1.bf16.msra.mxu0 0
    %283 = vmatprep.subr.bf16.mxu0 0
    %284 = vmatpush1.bf16.msra.mxu0 0
    %285 = vmatprep.subr.bf16.mxu0 0
    %286 = vmatpush1.bf16.msra.mxu0 0
    %287 = vmatprep.subr.bf16.mxu0 0
    %288 = vmatpush1.bf16.msra.mxu0 %v271
    %289 = vmatprep.subr.bf16.mxu0 0
    %290 = vmatpush2.bf16.msra.mxu0 0
    %291 = vmatprep.subr.bf16.mxu0 0
    %292 = vmatpush2.bf16.msra.mxu0 0
    %293 = vmatprep.subr.bf16.mxu0 0
    %294 = vmatpush2.bf16.msra.mxu0 0
    %295 = vmatprep.subr.bf16.mxu0 0
    %296 = vmatpush2.bf16.msra.mxu0 0
    %297 = vmatprep.subr.bf16.mxu0 0
    %298 = vmatpush2.bf16.msra.mxu0 0
    %299 = vmatprep.subr.bf16.mxu0 0
    %300 = vmatpush2.bf16.msra.mxu0 0
    %301 = vmatprep.subr.bf16.mxu0 0
    %302 = vmatpush2.bf16.msra.mxu0 0
    %303 = vmatprep.subr.bf16.mxu0 0
    %304 = vmatpush2.bf16.msra.mxu0 0
    %305 = vmatprep.mubr.bf16.mxu0 0
    %306 = vmatmul.mubr.bf16.gmra.mxu0 %v258
    %v307 = vpop.f32.mrf.mxu0
    %v308 = vadd.f32 0.0, %v307
    %v309 = vpop.f32.mrf.mxu0
    %v310 = vpop.f32.mrf.mxu0
    %v311 = vadd.f32 0.0, %v310
    %v312 = vpop.f32.mrf.mxu0
    %313 = vmatprep.mubr.bf16.mxu0 0
    %314 = vmatmul.mubr.bf16.gmra.mxu0 %v261
    %v315 = vpop.f32.mrf.mxu0
    %v316 = vadd.f32 0.0, %v315
    %v317 = vpop.f32.mrf.mxu0
    %v318 = vpop.f32.mrf.mxu0
    %v319 = vadd.f32 0.0, %v318
    %v320 = vpop.f32.mrf.mxu0
    %321 = vmatprep.mubr.bf16.mxu0 0
    %322 = vmatmul.mubr.bf16.gmra.mxu0 %v264
    %v323 = vpop.f32.mrf.mxu0
    %v324 = vadd.f32 0.0, %v323
    %v325 = vpop.f32.mrf.mxu0
    %v326 = vpop.f32.mrf.mxu0
    %v327 = vadd.f32 0.0, %v326
    %v328 = vpop.f32.mrf.mxu0
    %329 = vmatprep.mubr.bf16.mxu0 0
    %330 = vmatmul.mubr.bf16.gmra.mxu0 %v267
    %v331 = vpop.f32.mrf.mxu0
    %v332 = vadd.f32 0.0, %v331
    %v333 = vpop.f32.mrf.mxu0
    %v334 = vpop.f32.mrf.mxu0
    %v335 = vpop.f32.mrf.mxu0
    %336 = vdwg.mxu0
    %v369 = vunpack.c.l.b16 %v223
    %v370 = vunpack.c.l.b16 %v224
    %v371 = vunpack.c.l.b16 %v225
    %v372 = vunpack.c.l.b16 %v226
    %v373 = vunpack.c.l.b16 %v227
    %v374 = vunpack.c.l.b16 %v228
    %v375 = vunpack.c.l.b16 %v229
    %v376 = vunpack.c.l.b16 %v230
    %v377 = vunpack.c.l.b16 %v231
    %v378 = vunpack.c.l.b16 %v232
    %v379 = vunpack.c.l.b16 %v233
    %v380 = vunpack.c.l.b16 %v234
    %v381 = vunpack.c.l.b16 %v235
    %v382 = vunpack.c.l.b16 %v236
    %v383 = vunpack.c.l.b16 %v237
    %v384 = vunpack.c.l.b16 %v238
    %v385 = vunpack.c.l.b16 %v239
    %v386 = vunpack.c.l.b16 %v240
    %v387 = vunpack.c.l.b16 %v241
    %v388 = vunpack.c.l.b16 %v242
    %v389 = vunpack.c.l.b16 %v243
    %v390 = vunpack.c.l.b16 %v244
    %v391 = vunpack.c.l.b16 %v245
    %v392 = vunpack.c.l.b16 %v246
    %v393 = vunpack.c.l.b16 %v247
    %v394 = vunpack.c.l.b16 %v248
    %v395 = vunpack.c.l.b16 %v249
    %v396 = vunpack.c.l.b16 %v250
    %v397 = vunpack.c.l.b16 %v251
    %v398 = vunpack.c.l.b16 %v252
    %v399 = vunpack.c.l.b16 %v253
    %v400 = vunpack.c.l.b16 %v254
    %v401 = vpack.c.b16 %v370, %v369
    %v402 = vpack.c.b16 %v372, %v371
    %v403 = vpack.c.b16 %v374, %v373
    %v404 = vpack.c.b16 %v376, %v375
    %v405 = vpack.c.b16 %v378, %v377
    %v406 = vpack.c.b16 %v380, %v379
    %v407 = vpack.c.b16 %v382, %v381
    %v408 = vpack.c.b16 %v384, %v383
    %v409 = vpack.c.b16 %v386, %v385
    %v410 = vpack.c.b16 %v388, %v387
    %v411 = vpack.c.b16 %v390, %v389
    %v412 = vpack.c.b16 %v392, %v391
    %v413 = vpack.c.b16 %v394, %v393
    %v414 = vpack.c.b16 %v396, %v395
    %v415 = vpack.c.b16 %v398, %v397
    %v416 = vpack.c.b16 %v400, %v399
    %433 = vmatprep.subr.bf16.mxu0 0
    %434 = vmatpush1.bf16.msra.mxu0 %v408
    %435 = vmatprep.subr.bf16.mxu0 0
    %436 = vmatpush1.bf16.msra.mxu0 %v407
    %437 = vmatprep.subr.bf16.mxu0 0
    %438 = vmatpush1.bf16.msra.mxu0 %v406
    %439 = vmatprep.subr.bf16.mxu0 0
    %440 = vmatpush1.bf16.msra.mxu0 %v405
    %441 = vmatprep.subr.bf16.mxu0 0
    %442 = vmatpush1.bf16.msra.mxu0 %v404
    %443 = vmatprep.subr.bf16.mxu0 0
    %444 = vmatpush1.bf16.msra.mxu0 %v403
    %445 = vmatprep.subr.bf16.mxu0 0
    %446 = vmatpush1.bf16.msra.mxu0 %v402
    %447 = vmatprep.subr.bf16.mxu0 0
    %448 = vmatpush1.bf16.msra.mxu0 %v401
    %449 = vmatprep.subr.bf16.mxu0 0
    %450 = vmatpush2.bf16.msra.mxu0 %v416
    %451 = vmatprep.subr.bf16.mxu0 0
    %452 = vmatpush2.bf16.msra.mxu0 %v415
    %453 = vmatprep.subr.bf16.mxu0 0
    %454 = vmatpush2.bf16.msra.mxu0 %v414
    %455 = vmatprep.subr.bf16.mxu0 0
    %456 = vmatpush2.bf16.msra.mxu0 %v413
    %457 = vmatprep.subr.bf16.mxu0 0
    %458 = vmatpush2.bf16.msra.mxu0 %v412
    %459 = vmatprep.subr.bf16.mxu0 0
    %460 = vmatpush2.bf16.msra.mxu0 %v411
    %461 = vmatprep.subr.bf16.mxu0 0
    %462 = vmatpush2.bf16.msra.mxu0 %v410
    %463 = vmatprep.subr.bf16.mxu0 0
    %464 = vmatpush2.bf16.msra.mxu0 %v409
    %465 = vmatprep.mubr.bf16.mxu0 %v216
    %466 = vmatmul.mubr.bf16.gmra.mxu0 %v215
    %v467 = vpop.f32.mrf.mxu0
    %v468 = vadd.f32 %v308, %v467
    %v469 = vpop.f32.mrf.mxu0
    %v470 = vpop.f32.mrf.mxu0
    %v471 = vadd.f32 %v311, %v470
    %v472 = vpop.f32.mrf.mxu0
    %473 = vmatprep.mubr.bf16.mxu0 %v218
    %474 = vmatmul.mubr.bf16.gmra.mxu0 %v217
    %v475 = vpop.f32.mrf.mxu0
    %v476 = vadd.f32 %v316, %v475
    %v477 = vpop.f32.mrf.mxu0
    %v478 = vpop.f32.mrf.mxu0
    %v479 = vadd.f32 %v319, %v478
    %v480 = vpop.f32.mrf.mxu0
    %481 = vmatprep.mubr.bf16.mxu0 %v220
    %482 = vmatmul.mubr.bf16.gmra.mxu0 %v219
    %v483 = vpop.f32.mrf.mxu0
    %v484 = vadd.f32 %v324, %v483
    %v485 = vpop.f32.mrf.mxu0
    %v486 = vpop.f32.mrf.mxu0
    %v487 = vadd.f32 %v327, %v486
    %v488 = vpop.f32.mrf.mxu0
    %489 = vmatprep.mubr.bf16.mxu0 %v222
    %490 = vmatmul.mubr.bf16.gmra.mxu0 %v221
    %v491 = vpop.f32.mrf.mxu0
    %v492 = vadd.f32 %v332, %v491
    %v493 = vpop.f32.mrf.mxu0
    %v494 = vpop.f32.mrf.mxu0
    %v495 = vpop.f32.mrf.mxu0
    %496 = vdwg.mxu0
    %v497 = vld [vmem:[%s6] sm:$0x1]
    %v499 = vlaneseq
    %v500 = vshrl.u32 %v499, 7
    %v501 = vsub.s32 0, %v500
    %v502 = vrot.slane %v497, %v501
    %v504 = vadd.f32 %v468, %v502
    %v505 = vadd.f32 %v471, %v502
    %v506 = vadd.f32 %v476, %v502
    %v507 = vadd.f32 %v479, %v502
    %v508 = vadd.f32 %v484, %v502
    %v509 = vadd.f32 %v487, %v502
    %v510 = vadd.f32 %v492, %v502
    %v511 = vmax.f32 %v504, 0.0
    %v512 = vmax.f32 %v505, 0.0
    %v513 = vmax.f32 %v506, 0.0
    %v514 = vmax.f32 %v507, 0.0
    %v515 = vmax.f32 %v508, 0.0
    %v516 = vmax.f32 %v509, 0.0
    %v517 = vmax.f32 %v510, 0.0
    %v518 = vld [vmem:[%s7] sm:$0x1]
    %v519 = vpack.c.bf16 %v512, %v511
    %v520 = vpack.c.bf16 %v514, %v513
    %v521 = vpack.c.bf16 %v516, %v515
    %v522 = vpack.c.bf16 %v517, %v517
    %s523 = sld [smem:[#allocation2]]
    %v524 = vstv %s523
    %525 = vmatprep.subr.bf16.mxu0 0
    %526 = vmatpush1.bf16.xpose.msra.mxu0 0
    %527 = vmatprep.subr.bf16.mxu0 0
    %528 = vmatpush1.bf16.xpose.msra.mxu0 0
    %529 = vmatprep.subr.bf16.mxu0 0
    %530 = vmatpush1.bf16.xpose.msra.mxu0 0
    %531 = vmatprep.subr.bf16.mxu0 0
    %532 = vmatpush1.bf16.xpose.msra.mxu0 0
    %533 = vmatprep.subr.bf16.mxu0 0
    %534 = vmatpush1.bf16.xpose.msra.mxu0 %v522
    %535 = vmatprep.subr.bf16.mxu0 0
    %536 = vmatpush1.bf16.xpose.msra.mxu0 %v521
    %537 = vmatprep.subr.bf16.mxu0 0
    %538 = vmatpush1.bf16.xpose.msra.mxu0 %v520
    %539 = vmatprep.subr.bf16.mxu0 0
    %540 = vmatpush1.bf16.xpose.msra.mxu0 %v519
    %541 = vmatprep.subr.bf16.mxu0 0
    %542 = vmatpush2.bf16.xpose.msra.mxu0 0
    %543 = vmatprep.subr.bf16.mxu0 0
    %544 = vmatpush2.bf16.xpose.msra.mxu0 0
    %545 = vmatprep.subr.bf16.mxu0 0
    %546 = vmatpush2.bf16.xpose.msra.mxu0 0
    %547 = vmatprep.subr.bf16.mxu0 0
    %548 = vmatpush2.bf16.xpose.msra.mxu0 0
    %549 = vmatprep.subr.bf16.mxu0 0
    %550 = vmatpush2.bf16.xpose.msra.mxu0 0
    %551 = vmatprep.subr.bf16.mxu0 0
    %552 = vmatpush2.bf16.xpose.msra.mxu0 0
    %553 = vmatprep.subr.bf16.mxu0 0
    %554 = vmatpush2.bf16.xpose.msra.mxu0 0
    %555 = vmatprep.subr.bf16.mxu0 0
    %556 = vmatpush2.bf16.xpose.msra.mxu0 0
    %557 = vmatprep.mubr.bf16.mxu0 0
    %558 = vmatmul.mubr.bf16.gmra.mxu0 %v518
    %v559 = vpop.f32.mrf.mxu0
    %v560 = vadd.f32 %v524, %v559
    %v561 = vpop.f32.mrf.mxu0
    %v562 = vpop.f32.mrf.mxu0
    %v563 = vpop.f32.mrf.mxu0
    %564 = vdwg.mxu0
    %vm565 = vcmask 401408
    %566 = vst.msk [vmem:[#allocation8] sm:$0x1] %vm565, %v560
    // Predicated region
    $region46: #{tpu_custom_call.1} parent=1 // pred_check
      _
    $region47: #{tpu_custom_call.1} parent=1 // pred_check_branch
      %568 = sbr.rel (0) target = $region49
    $region48: #{tpu_custom_call.1} parent=1 // pred_region
      %s570 = ssub.s32 16, 16
      %571 = vsyncadd [#allocation5], %s570
      %s573 = sshll.u32 [#allocation8], 4
      %s574 = int_to_ptr.vmem [resolvable:$true] %s573
      %576 = dma.vmem_to_hbm [thread:$0]  %s574, 16, %s9, [#allocation5]
    $region49: #{tpu_custom_call.1} parent=1 // pred_fallthru
      _
    // Predicated region
    $region50: #{tpu_custom_call.1} parent=1 // pred_check
      _
    $region51: #{tpu_custom_call.1} parent=1 // pred_check_branch
      %578 = sbr.rel (0) target = $region53
    $region52: #{tpu_custom_call.1} parent=1 // pred_region
      %579 = dma.done [#allocation5], 16
    $region53: #{tpu_custom_call.1} parent=1 // pred_fallthru
      _
    %580 = vsyncpa [#allocation4], 1
    %581 = vsyncpa [#allocation7], 1
    %582 = vsyncpa [#allocation5], 1

</llo_original>
